<compile_context>
chip_gen: v5e
topology: v5e:2x2
jax: 0.10.0
libtpu: 0.0.40
codegen_flags: <defaults>
</compile_context>

<pallas_src>
import jax
import jax.numpy as jnp
from jax.experimental import pallas as pl
from jax.experimental.pallas import tpu as pltpu


def _round_up(x, m):
    return ((x + m - 1) // m) * m


def _pick_tile(dim_pad, candidates, keep_two=False):
    """Largest candidate dividing dim_pad; optionally keep >=2 tiles (v7x megacore)."""
    for c in candidates:
        if dim_pad % c:
            continue
        if keep_two and dim_pad > 128 and dim_pad // c < 2:
            continue
        return c
    return 128


# ---------------------------------------------------------------------------
# Kernels
# ---------------------------------------------------------------------------
def _noisy_linear_train_kernel(x_ref, wmu_ref, wsig_ref, ein_ref, eout_ref,
                               beff_ref, o_ref, acc_ref):
    """Fused noisy weight (rank-1 epsilon rebuilt in-kernel) + matmul."""
    k = pl.program_id(2)

    # (tk,1) * (1,tn) broadcast -> (tk,tn): a couple of VPU ops per vreg,
    # fully hidden under the remaining weight DMA.
    eps = ein_ref[...] * eout_ref[...]
    w = wmu_ref[...] + wsig_ref[...] * eps
    part = jnp.dot(x_ref[...], w.astype(x_ref.dtype),
                   preferred_element_type=jnp.float32)

    @pl.when(k == 0)
    def _first():
        acc_ref[...] = part          # skip the zeros-init pass

    @pl.when(k > 0)
    def _accum():
        acc_ref[...] += part

    @pl.when(k == pl.num_programs(2) - 1)
    def _finalize():
        o_ref[...] = (acc_ref[...] + beff_ref[...]).astype(o_ref.dtype)


def _linear_kernel(x_ref, w_ref, b_ref, o_ref, acc_ref):
    """Plain linear: used for eval (w_mu, b_mu) and the cached-w_eff path."""
    k = pl.program_id(2)
    part = jnp.dot(x_ref[...], w_ref[...].astype(x_ref.dtype),
                   preferred_element_type=jnp.float32)

    @pl.when(k == 0)
    def _first():
        acc_ref[...] = part

    @pl.when(k > 0)
    def _accum():
        acc_ref[...] += part

    @pl.when(k == pl.num_programs(2) - 1)
    def _finalize():
        o_ref[...] = (acc_ref[...] + b_ref[...]).astype(o_ref.dtype)


# ---------------------------------------------------------------------------
# One-time prepare (per parameter update / reset_noise) -- NOT the hot path.
# ---------------------------------------------------------------------------
def prepare_noisy_linear(weight_mu, weight_sigma, eps_in, eps_out,
                         bias_mu, bias_sigma, *, weight_dtype=jnp.float32):
    """Relayout + pad the parameters once.

    weight_* : (Out, In) in PyTorch layout.
    eps_in   : (In,), eps_out : (Out,)  -- factorized noise factors, so
               weight_epsilon == outer(eps_out, eps_in), bias_epsilon == eps_out.
    bias_*   : (Out,)
    weight_dtype: set to jnp.bfloat16 to halve weight HBM traffic (MXU
               accumulation stays f32).
    """
    Out, In = weight_mu.shape
    In_pad = _round_up(In, 128)
    Out_pad = _round_up(Out, 128)
    tk = _pick_tile(In_pad, (1024, 512, 256, 128))             # large K DMAs
    tn = _pick_tile(Out_pad, (512, 256, 128), keep_two=True)   # lane-dense, >=2 tiles

    def pad2(a, r, c):
        if a.shape == (r, c):
            return a
        return jnp.pad(a, ((0, r - a.shape[0]), (0, c - a.shape[1])))

    w_mu_p = pad2(weight_mu.T, In_pad, Out_pad).astype(weight_dtype)
    w_sigma_p = pad2(weight_sigma.T, In_pad, Out_pad).astype(weight_dtype)
    eps_in_col = pad2(eps_in.reshape(In, 1), In_pad, 1).astype(weight_dtype)
    eps_out_row = pad2(eps_out.reshape(1, Out), 1, Out_pad).astype(weight_dtype)

    b_mu_row = pad2(bias_mu.reshape(1, Out), 1, Out_pad).astype(jnp.float32)
    # Fold the three bias streams into one effective row (tiny XLA op, once).
    b_eff = bias_mu + bias_sigma * eps_out
    b_eff_row = pad2(b_eff.reshape(1, Out), 1, Out_pad).astype(jnp.float32)

    return dict(In=In, Out=Out, In_pad=In_pad, Out_pad=Out_pad, tk=tk, tn=tn,
                weight_dtype=weight_dtype,
                w_mu_p=w_mu_p, w_sigma_p=w_sigma_p,
                eps_in_col=eps_in_col, eps_out_row=eps_out_row,
                b_mu_row=b_mu_row, b_eff_row=b_eff_row)


def make_effective_weights(prep):
    """Optional: precompute w_eff once per reset_noise(); cached forwards then
    stream only ONE weight matrix (use noisy_linear(..., cached_w_eff=...))."""
    w_eff = (prep["w_mu_p"].astype(jnp.float32)
             + prep["w_sigma_p"].astype(jnp.float32)
             * prep["eps_in_col"].astype(jnp.float32)
             * prep["eps_out_row"].astype(jnp.float32))
    return w_eff.astype(prep["weight_dtype"])


# ---------------------------------------------------------------------------
# Forward (hot path: only the activation is padded per call).
# ---------------------------------------------------------------------------
def noisy_linear(x, prep, *, training=True, cached_w_eff=None):
    """x: (B, In) -> (B, Out), dtype of x."""
    B, In = x.shape
    assert In == prep["In"], "input feature dim mismatch"
    In_pad, Out_pad = prep["In_pad"], prep["Out_pad"]
    tk, tn, Out = prep["tk"], prep["tn"], prep["Out"]

    # Batch tile: whole (padded) batch when small; 256-row tiles for large B
    # (v6e/v7x 2x256^2 MXU), never split an 8-row batch.
    tm = 256 if B >= 256 and B % 256 == 0 else min(_round_up(B, 8), 128)
    B_pad = _round_up(B, tm)

    xp = x
    if xp.shape != (B_pad, In_pad):
        xp = jnp.pad(x, ((0, B_pad - B), (0, In_pad - In)))

    grid = (B_pad // tm, Out_pad // tn, In_pad // tk)

    x_spec = pl.BlockSpec((tm, tk), lambda i, j, k: (i, k))
    w_spec = pl.BlockSpec((tk, tn), lambda i, j, k: (k, j))
    ein_spec = pl.BlockSpec((tk, 1), lambda i, j, k: (k, 0))
    eout_spec = pl.BlockSpec((1, tn), lambda i, j, k: (0, j))
    b_spec = pl.BlockSpec((1, tn), lambda i, j, k: (0, j))
    o_spec = pl.BlockSpec((tm, tn), lambda i, j, k: (i, j))

    wbytes = jnp.dtype(prep["weight_dtype"]).itemsize
    xbytes = jnp.dtype(x.dtype).itemsize

    if training and cached_w_eff is None:
        # Fused path: 2 weight matrices + 2 tiny noise vectors streamed.
        kernel = _noisy_linear_train_kernel
        in_specs = [x_spec, w_spec, w_spec, ein_spec, eout_spec, b_spec]
        args = (xp, prep["w_mu_p"], prep["w_sigma_p"],
                prep["eps_in_col"], prep["eps_out_row"], prep["b_eff_row"])
        n_w = 2
    elif training:
        # Cached path: precomputed w_eff, 1 weight matrix streamed.
        kernel = _linear_kernel
        in_specs = [x_spec, w_spec, b_spec]
        args = (xp, cached_w_eff, prep["b_eff_row"])
        n_w = 1
    else:
        # Eval: w_mu / b_mu only.
        kernel = _linear_kernel
        in_specs = [x_spec, w_spec, b_spec]
        args = (xp, prep["w_mu_p"], prep["b_mu_row"])
        n_w = 1

    # Explicit double-buffered VMEM budget (review: don't rely on the default
    # scoped limit, keep well under v7x's 64 MiB physical VMEM).
    footprint = (2 * tm * tk * xbytes                 # x tiles
                 + 2 * n_w * tk * tn * wbytes         # weight tiles
                 + 2 * (tk + tn) * wbytes             # eps vectors
                 + 2 * tn * 4                         # bias row
                 + 2 * tm * tn * xbytes               # output tiles
                 + tm * tn * 4)                       # f32 accumulator
    vmem_limit = int(min(48 * 1024 * 1024, max(32 * 1024 * 1024, 2 * footprint)))

    y = pl.pallas_call(
        kernel,
        out_shape=jax.ShapeDtypeStruct((B_pad, Out_pad), x.dtype),
        grid_spec=pltpu.PrefetchScalarGridSpec(
            num_scalar_prefetch=0,
            grid=grid,
            in_specs=in_specs,
            out_specs=o_spec,
            scratch_shapes=[pltpu.VMEM((tm, tn), jnp.float32)],
        ),
        compiler_params=pltpu.CompilerParams(
            dimension_semantics=("parallel", "parallel", "arbitrary"),
            vmem_limit_bytes=vmem_limit),
    )(*args)

    return y[:B, :Out]


# ---------------------------------------------------------------------------
# Parameter init (deterministic re-implementation of __init__/reset_*).
# Returned in PyTorch layout plus the rank-1 noise factors.
# ---------------------------------------------------------------------------
def init_noisy_linear_params(key, in_features, out_features, sigma_init=0.017):
    k_wmu, k_bmu, k_ein, k_eout = jax.random.split(key, 4)
    bound = 1.0 / (in_features ** 0.5)

    weight_mu = jax.random.uniform(
        k_wmu, (out_features, in_features), jnp.float32, -bound, bound)
    bias_mu = jax.random.uniform(
        k_bmu, (out_features,), jnp.float32, -bound, bound)

    weight_sigma = jnp.full((out_features, in_features), sigma_init, jnp.float32)
    bias_sigma = jnp.full((out_features,), sigma_init, jnp.float32)

    def scale_noise(k, size):
        z = jax.random.normal(k, (size,), jnp.float32)
        return jnp.sign(z) * jnp.sqrt(jnp.abs(z))

    eps_in = scale_noise(k_ein, in_features)
    eps_out = scale_noise(k_eout, out_features)
    # Full matrices kept only for the reference check; the kernel uses the
    # rank-1 factors (valid because reset_noise() builds outer(eps_out, eps_in)).
    weight_epsilon = jnp.outer(eps_out, eps_in)
    bias_epsilon = eps_out

    return dict(weight_mu=weight_mu, weight_sigma=weight_sigma,
                weight_epsilon=weight_epsilon, bias_mu=bias_mu,
                bias_sigma=bias_sigma, bias_epsilon=bias_epsilon,
                eps_in=eps_in, eps_out=eps_out)


if __name__ == "__main__":
    batch, in_features, out_features = 8, 32, 64

    key = jax.random.PRNGKey(0)
    k_params, k_x = jax.random.split(key)
    params = init_noisy_linear_params(k_params, in_features, out_features)
    x = jax.random.normal(k_x, (batch, in_features), jnp.float32)

    # One-time relayout + padding (per parameter / noise update).
    prep = prepare_noisy_linear(
        params["weight_mu"], params["weight_sigma"],
        params["eps_in"], params["eps_out"],
        params["bias_mu"], params["bias_sigma"],
        weight_dtype=jnp.float32)

    # Training forward (fused rank-1 noise in-kernel).
    y_train = noisy_linear(x, prep, training=True)
    # Eval forward (mu only).
    y_eval = noisy_linear(x, prep, training=False)
    # Cached-noise training forward (w_eff precomputed once per reset_noise).
    w_eff_p = make_effective_weights(prep)
    y_cached = noisy_linear(x, prep, training=True, cached_w_eff=w_eff_p)

    y_train, y_eval, y_cached = jax.block_until_ready((y_train, y_eval, y_cached))

    # Pure-JAX references (same math as the PyTorch forward).
    w_eff = params["weight_mu"] + params["weight_sigma"] * params["weight_epsilon"]
    b_eff = params["bias_mu"] + params["bias_sigma"] * params["bias_epsilon"]
    y_train_ref = x @ w_eff.T + b_eff
    y_eval_ref = x @ params["weight_mu"].T + params["bias_mu"]

    assert y_train.shape == (batch, out_features)
    assert y_eval.shape == (batch, out_features)
    assert y_cached.shape == (batch, out_features)
    assert jnp.allclose(y_train, y_train_ref, atol=1e-3, rtol=1e-3)
    assert jnp.allclose(y_eval, y_eval_ref, atol=1e-3, rtol=1e-3)
    assert jnp.allclose(y_cached, y_train_ref, atol=1e-3, rtol=1e-3)

    print("KERNEL_OK")
</pallas_src>

<mosaic_0001>
module attributes {stable_mosaic.version = 11 : i64} {
  func.func @_noisy_linear_train_kernel(%arg0: i32, %arg1: i32, %arg2: i32, %arg3: memref<8x128xf32, #tpu.memory_space<vmem>>, %arg4: memref<128x128xf32, #tpu.memory_space<vmem>>, %arg5: memref<128x128xf32, #tpu.memory_space<vmem>>, %arg6: memref<128x1xf32, #tpu.memory_space<vmem>>, %arg7: memref<1x128xf32, #tpu.memory_space<vmem>>, %arg8: memref<1x128xf32, #tpu.memory_space<vmem>>, %arg9: memref<8x128xf32, #tpu.memory_space<vmem>>, %arg10: memref<8x128xf32, #tpu.memory_space<vmem>>) attributes {dimension_semantics = [#tpu.dimension_semantics<parallel>, #tpu.dimension_semantics<parallel>, #tpu.dimension_semantics<arbitrary>], iteration_bounds = array<i64: 1, 1, 1>, scalar_prefetch = 0 : i64, scratch_operands = 1 : i64, tpu.core_type = #tpu.core_type<tc>, window_params = [{transform_indices = @transform_0, window_bounds = array<i64: 8, 128>}, {transform_indices = @transform_1, window_bounds = array<i64: 128, 128>}, {transform_indices = @transform_2, window_bounds = array<i64: 128, 128>}, {transform_indices = @transform_3, window_bounds = array<i64: 128, 1>}, {transform_indices = @transform_4, window_bounds = array<i64: 1, 128>}, {transform_indices = @transform_5, window_bounds = array<i64: 1, 128>}, {transform_indices = @transform_6, window_bounds = array<i64: 8, 128>}]} {
    %c0 = arith.constant 0 : index
    %c0_0 = arith.constant 0 : index
    %0 = vector.load %arg6[%c0, %c0_0] : memref<128x1xf32, #tpu.memory_space<vmem>>, vector<128x1xf32>
    %c0_1 = arith.constant 0 : index
    %c0_2 = arith.constant 0 : index
    %1 = vector.load %arg7[%c0_1, %c0_2] : memref<1x128xf32, #tpu.memory_space<vmem>>, vector<1x128xf32>
    %2 = vector.broadcast %0 : vector<128x1xf32> to vector<128x128xf32>
    %3 = vector.broadcast %1 : vector<1x128xf32> to vector<128x128xf32>
    %4 = arith.mulf %2, %3 : vector<128x128xf32>
    %c0_3 = arith.constant 0 : index
    %c0_4 = arith.constant 0 : index
    %5 = vector.load %arg4[%c0_3, %c0_4] : memref<128x128xf32, #tpu.memory_space<vmem>>, vector<128x128xf32>
    %c0_5 = arith.constant 0 : index
    %c0_6 = arith.constant 0 : index
    %6 = vector.load %arg5[%c0_5, %c0_6] : memref<128x128xf32, #tpu.memory_space<vmem>>, vector<128x128xf32>
    %7 = arith.mulf %6, %4 : vector<128x128xf32>
    %8 = arith.addf %5, %7 : vector<128x128xf32>
    %c0_7 = arith.constant 0 : index
    %c0_8 = arith.constant 0 : index
    %9 = vector.load %arg3[%c0_7, %c0_8] : memref<8x128xf32, #tpu.memory_space<vmem>>, vector<8x128xf32>
    %cst = arith.constant dense<0.000000e+00> : vector<8x128xf32>
    %10 = tpu.matmul %9, %8, %cst {dimension_numbers = #tpu.dot_dimension_numbers<[1], [0], [0], [1], [0, 0, 1, 1], [], []>} : vector<8x128xf32>, vector<128x128xf32>, vector<8x128xf32> -> vector<8x128xf32>
    %c0_i32 = arith.constant 0 : i32
    %11 = arith.cmpi eq, %arg2, %c0_i32 : i32
    %12 = arith.extui %11 : i1 to i32
    %c0_i32_9 = arith.constant 0 : i32
    %13 = arith.cmpi ne, %12, %c0_i32_9 : i32
    scf.if %13 {
      %c0_14 = arith.constant 0 : index
      %c0_15 = arith.constant 0 : index
      %20 = vector.load %arg10[%c0_14, %c0_15] : memref<8x128xf32, #tpu.memory_space<vmem>>, vector<8x128xf32>
      tpu.vector_store %arg10[%c0_14, %c0_15], %10 {strides = array<i32>} : memref<8x128xf32, #tpu.memory_space<vmem>>, vector<8x128xf32>,
    } else {
    }
    %c0_i32_10 = arith.constant 0 : i32
    %14 = arith.cmpi sgt, %arg2, %c0_i32_10 : i32
    %15 = arith.extui %14 : i1 to i32
    %c0_i32_11 = arith.constant 0 : i32
    %16 = arith.cmpi ne, %15, %c0_i32_11 : i32
    scf.if %16 {
      %c0_14 = arith.constant 0 : index
      %c0_15 = arith.constant 0 : index
      %20 = vector.load %arg10[%c0_14, %c0_15] : memref<8x128xf32, #tpu.memory_space<vmem>>, vector<8x128xf32>
      %21 = arith.addf %20, %10 : vector<8x128xf32>
      %c0_16 = arith.constant 0 : index
      %c0_17 = arith.constant 0 : index
      %22 = vector.load %arg10[%c0_16, %c0_17] : memref<8x128xf32, #tpu.memory_space<vmem>>, vector<8x128xf32>
      tpu.vector_store %arg10[%c0_16, %c0_17], %21 {strides = array<i32>} : memref<8x128xf32, #tpu.memory_space<vmem>>, vector<8x128xf32>,
    } else {
    }
    %c0_i32_12 = arith.constant 0 : i32
    %17 = arith.cmpi eq, %arg2, %c0_i32_12 : i32
    %18 = arith.extui %17 : i1 to i32
    %c0_i32_13 = arith.constant 0 : i32
    %19 = arith.cmpi ne, %18, %c0_i32_13 : i32
    scf.if %19 {
      %c0_14 = arith.constant 0 : index
      %c0_15 = arith.constant 0 : index
      %20 = vector.load %arg10[%c0_14, %c0_15] : memref<8x128xf32, #tpu.memory_space<vmem>>, vector<8x128xf32>
      %c0_16 = arith.constant 0 : index
      %c0_17 = arith.constant 0 : index
      %21 = vector.load %arg8[%c0_16, %c0_17] : memref<1x128xf32, #tpu.memory_space<vmem>>, vector<1x128xf32>
      %22 = vector.broadcast %21 : vector<1x128xf32> to vector<8x128xf32>
      %23 = arith.addf %20, %22 : vector<8x128xf32>
      %c0_18 = arith.constant 0 : index
      %c0_19 = arith.constant 0 : index
      %24 = vector.load %arg9[%c0_18, %c0_19] : memref<8x128xf32, #tpu.memory_space<vmem>>, vector<8x128xf32>
      tpu.vector_store %arg9[%c0_18, %c0_19], %23 {strides = array<i32>} : memref<8x128xf32, #tpu.memory_space<vmem>>, vector<8x128xf32>,
    } else {
    }
    return
  }
  func.func @transform_0(%arg0: i32, %arg1: i32, %arg2: i32) -> (i32, i32) {
    %c0_i32 = arith.constant 0 : i32
    return %arg0, %arg2 : i32, i32
  }
  func.func @transform_1(%arg0: i32, %arg1: i32, %arg2: i32) -> (i32, i32) {
    %c0_i32 = arith.constant 0 : i32
    return %arg2, %arg1 : i32, i32
  }
  func.func @transform_2(%arg0: i32, %arg1: i32, %arg2: i32) -> (i32, i32) {
    %c0_i32 = arith.constant 0 : i32
    return %arg2, %arg1 : i32, i32
  }
  func.func @transform_3(%arg0: i32, %arg1: i32, %arg2: i32) -> (i32, i32) {
    %c0_i32 = arith.constant 0 : i32
    %c0_i32_0 = arith.constant 0 : i32
    return %arg2, %c0_i32 : i32, i32
  }
  func.func @transform_4(%arg0: i32, %arg1: i32, %arg2: i32) -> (i32, i32) {
    %c0_i32 = arith.constant 0 : i32
    %c0_i32_0 = arith.constant 0 : i32
    return %c0_i32, %arg1 : i32, i32
  }
  func.func @transform_5(%arg0: i32, %arg1: i32, %arg2: i32) -> (i32, i32) {
    %c0_i32 = arith.constant 0 : i32
    %c0_i32_0 = arith.constant 0 : i32
    return %c0_i32, %arg1 : i32, i32
  }
  func.func @transform_6(%arg0: i32, %arg1: i32, %arg2: i32) -> (i32, i32) {
    %c0_i32 = arith.constant 0 : i32
    return %arg0, %arg1 : i32, i32
  }
}

</mosaic_0001>

<llo_original>
// kernel: tpu_custom_call.1
$region0: #{tpu_custom_call.1}
  #allocation0 [shape = 'u32[]', space=smem, size = 0x4, offset = 0x4, fixed_abs, tag = 'smem constant byte address 0x4 - core index']
  #allocation1 [shape = 'u32[72,128]{1,0:T(1,128)}', space=vmem, size = 0x9000, scoped, tag = 'internal scratch']
  #allocation2 [shape = 'f32[8,128]{1,0:T(8,128)}', space=vmem, size = 0x1000, scoped, tag = 'scratch operand']
  %s0 = inlined_call_operand.hbm [shape: f32[8,128], index: 0, kind: input, shape index: {}]
  %s1 = inlined_call_operand.vmem [shape: f32[128,128], index: 1, kind: input, shape index: {}]
  %s2 = inlined_call_operand.hbm [shape: f32[128,128], index: 2, kind: input, shape index: {}]
  %s3 = inlined_call_operand.vmem [shape: f32[128,1], index: 3, kind: input, shape index: {}]
  %s4 = inlined_call_operand.vmem [shape: f32[1,128], index: 4, kind: input, shape index: {}]
  %s5 = inlined_call_operand.vmem [shape: f32[1,128], index: 5, kind: input, shape index: {}]
  %s6 = inlined_call_operand.hbm [shape: f32[8,128], index: 6, kind: output, shape index: {}]
  %s7 = sld [smem:[#allocation0]]
  $region54: #{tpu_custom_call.1} parent=0
    _
  %s9 = ssub.s32 1, %s7
  %s10 = scalar_select 0, %s9, %s7
  $region1: #{tpu_custom_call.1} parent=0
    #allocation3 [shape = 'u8[4096]{0}', space=vmem, size = 0x1000, scoped, tag = 'input window, operand 0, single buffered']
    #allocation4 [shape = 's32[1]{0}', space=sflag, size = 0x4, scoped, tag = 'scoped memory for tpu_custom_call.1']
    #allocation5 [shape = 's32[1]{0}', space=sflag, size = 0x4, scoped, tag = 'scoped memory for tpu_custom_call.1']
    #allocation6 [shape = 'u8[65536]{0}', space=vmem, size = 0x10000, scoped, tag = 'input window, operand 2, single buffered']
    #allocation7 [shape = 's32[1]{0}', space=sflag, size = 0x4, scoped, tag = 'scoped memory for tpu_custom_call.1']
    #allocation8 [shape = 'u8[4096]{0}', space=vmem, size = 0x1000, scoped, tag = 'output window, operand 0, single buffered']
    %11 = vsyncpa [#allocation4], 0
    %12 = vsyncpa [#allocation7], 0
    %13 = vsyncpa [#allocation5], 0
    // Predicated region
    $region2: #{tpu_custom_call.1} parent=1 // pred_check
      _
    $region3: #{tpu_custom_call.1} parent=1 // pred_check_branch
      %15 = sbr.rel (0) target = $region5
    $region4: #{tpu_custom_call.1} parent=1 // pred_region
      %17 = vsyncadd [#allocation4], 0
      %s19 = sshll.u32 %s0, 4
      %s20 = int_to_ptr.hbm [resolvable:$true] %s19
      %s21 = sshll.u32 [#allocation3], 4
      %s22 = int_to_ptr.vmem [resolvable:$true] %s21
      %24 = dma.hbm_to_vmem [thread:$0]  %s20, 128, %s22, [#allocation4]
    $region5: #{tpu_custom_call.1} parent=1 // pred_fallthru
      _
    // Predicated region
    $region6: #{tpu_custom_call.1} parent=1 // pred_check
      _
    $region7: #{tpu_custom_call.1} parent=1 // pred_check_branch
      %26 = sbr.rel (0) target = $region9
    $region8: #{tpu_custom_call.1} parent=1 // pred_region
      _
    $region9: #{tpu_custom_call.1} parent=1 // pred_fallthru
      _
    // Predicated region
    $region10: #{tpu_custom_call.1} parent=1 // pred_check
      _
    $region11: #{tpu_custom_call.1} parent=1 // pred_check_branch
      %28 = sbr.rel (0) target = $region13
    $region12: #{tpu_custom_call.1} parent=1 // pred_region
      %30 = vsyncadd [#allocation7], 0
      %s31 = sshll.u32 %s2, 4
      %s32 = int_to_ptr.hbm [resolvable:$true] %s31
      %s33 = sshll.u32 [#allocation6], 4
      %s34 = int_to_ptr.vmem [resolvable:$true] %s33
      %39 = dma.hbm_to_vmem [thread:$0]  %s32, 2048, %s34, [#allocation7], 128, 128, 8
    $region13: #{tpu_custom_call.1} parent=1 // pred_fallthru
      _
    // Predicated region
    $region14: #{tpu_custom_call.1} parent=1 // pred_check
      _
    $region15: #{tpu_custom_call.1} parent=1 // pred_check_branch
      %41 = sbr.rel (0) target = $region17
    $region16: #{tpu_custom_call.1} parent=1 // pred_region
      _
    $region17: #{tpu_custom_call.1} parent=1 // pred_fallthru
      _
    // Predicated region
    $region18: #{tpu_custom_call.1} parent=1 // pred_check
      _
    $region19: #{tpu_custom_call.1} parent=1 // pred_check_branch
      %43 = sbr.rel (0) target = $region21
    $region20: #{tpu_custom_call.1} parent=1 // pred_region
      _
    $region21: #{tpu_custom_call.1} parent=1 // pred_fallthru
      _
    // Predicated region
    $region22: #{tpu_custom_call.1} parent=1 // pred_check
      _
    $region23: #{tpu_custom_call.1} parent=1 // pred_check_branch
      %45 = sbr.rel (0) target = $region25
    $region24: #{tpu_custom_call.1} parent=1 // pred_region
      _
    $region25: #{tpu_custom_call.1} parent=1 // pred_fallthru
      _
    // Predicated region
    $region26: #{tpu_custom_call.1} parent=1 // pred_check
      _
    $region27: #{tpu_custom_call.1} parent=1 // pred_check_branch
      %47 = sbr.rel (0) target = $region29
    $region28: #{tpu_custom_call.1} parent=1 // pred_region
      %49 = dma.done [#allocation4], 128
    $region29: #{tpu_custom_call.1} parent=1 // pred_fallthru
      _
    // Predicated region
    $region30: #{tpu_custom_call.1} parent=1 // pred_check
      _
    $region31: #{tpu_custom_call.1} parent=1 // pred_check_branch
      %51 = sbr.rel (0) target = $region33
    $region32: #{tpu_custom_call.1} parent=1 // pred_region
      %53 = dma.done [#allocation7], 2048
    $region33: #{tpu_custom_call.1} parent=1 // pred_fallthru
      _
    %v54 = vld [vmem:[%s3] sm:$0xff]
    %v55 = vld [vmem:[%s3 + $0x8] sm:$0xff]
    %v56 = vld [vmem:[%s3 + $0x10] sm:$0xff]
    %v57 = vld [vmem:[%s3 + $0x18] sm:$0xff]
    %v58 = vld [vmem:[%s3 + $0x20] sm:$0xff]
    %v59 = vld [vmem:[%s3 + $0x28] sm:$0xff]
    %v60 = vld [vmem:[%s3 + $0x30] sm:$0xff]
    %v61 = vld [vmem:[%s3 + $0x38] sm:$0xff]
    %v62 = vld [vmem:[%s3 + $0x40] sm:$0xff]
    %v63 = vld [vmem:[%s3 + $0x48] sm:$0xff]
    %v64 = vld [vmem:[%s3 + $0x50] sm:$0xff]
    %v65 = vld [vmem:[%s3 + $0x58] sm:$0xff]
    %v66 = vld [vmem:[%s3 + $0x60] sm:$0xff]
    %v67 = vld [vmem:[%s3 + $0x68] sm:$0xff]
    %v68 = vld [vmem:[%s3 + $0x70] sm:$0xff]
    %v69 = vld [vmem:[%s3 + $0x78] sm:$0xff]
    %v70 = vld [vmem:[%s4] sm:$0x1]
    %72 = vset.pattern.permute.xlu0 0
    %73 = vperm.xlu0 %72, %v54
    %v74 = vpop.permute.xlu0 %73
    %77 = vset.pattern.permute.xlu0 0
    %78 = vperm.xlu0 %77, %v55
    %v79 = vpop.permute.xlu0 %78
    %82 = vset.pattern.permute.xlu0 0
    %83 = vperm.xlu0 %82, %v56
    %v84 = vpop.permute.xlu0 %83
    %87 = vset.pattern.permute.xlu0 0
    %88 = vperm.xlu0 %87, %v57
    %v89 = vpop.permute.xlu0 %88
    %92 = vset.pattern.permute.xlu0 0
    %93 = vperm.xlu0 %92, %v58
    %v94 = vpop.permute.xlu0 %93
    %97 = vset.pattern.permute.xlu0 0
    %98 = vperm.xlu0 %97, %v59
    %v99 = vpop.permute.xlu0 %98
    %102 = vset.pattern.permute.xlu0 0
    %103 = vperm.xlu0 %102, %v60
    %v104 = vpop.permute.xlu0 %103
    %107 = vset.pattern.permute.xlu0 0
    %108 = vperm.xlu0 %107, %v61
    %v109 = vpop.permute.xlu0 %108
    %112 = vset.pattern.permute.xlu0 0
    %113 = vperm.xlu0 %112, %v62
    %v114 = vpop.permute.xlu0 %113
    %117 = vset.pattern.permute.xlu0 0
    %118 = vperm.xlu0 %117, %v63
    %v119 = vpop.permute.xlu0 %118
    %122 = vset.pattern.permute.xlu0 0
    %123 = vperm.xlu0 %122, %v64
    %v124 = vpop.permute.xlu0 %123
    %127 = vset.pattern.permute.xlu0 0
    %128 = vperm.xlu0 %127, %v65
    %v129 = vpop.permute.xlu0 %128
    %132 = vset.pattern.permute.xlu0 0
    %133 = vperm.xlu0 %132, %v66
    %v134 = vpop.permute.xlu0 %133
    %137 = vset.pattern.permute.xlu0 0
    %138 = vperm.xlu0 %137, %v67
    %v139 = vpop.permute.xlu0 %138
    %142 = vset.pattern.permute.xlu0 0
    %143 = vperm.xlu0 %142, %v68
    %v144 = vpop.permute.xlu0 %143
    %147 = vset.pattern.permute.xlu0 0
    %148 = vperm.xlu0 %147, %v69
    %v149 = vpop.permute.xlu0 %148
    %v152 = vperm.slane %v70, 0
    %v154 = vmul.f32 %v74, %v152
    %v155 = vmul.f32 %v79, %v152
    %v156 = vmul.f32 %v84, %v152
    %v157 = vmul.f32 %v89, %v152
    %v158 = vmul.f32 %v94, %v152
    %v159 = vmul.f32 %v99, %v152
    %v160 = vmul.f32 %v104, %v152
    %v161 = vmul.f32 %v109, %v152
    %v162 = vmul.f32 %v114, %v152
    %v163 = vmul.f32 %v119, %v152
    %v164 = vmul.f32 %v124, %v152
    %v165 = vmul.f32 %v129, %v152
    %v166 = vmul.f32 %v134, %v152
    %v167 = vmul.f32 %v139, %v152
    %v168 = vmul.f32 %v144, %v152
    %v169 = vmul.f32 %v149, %v152
    %v170 = vld [vmem:[%s1] sm:$0xff]
    %v171 = vld [vmem:[%s1 + $0x8] sm:$0xff]
    %v172 = vld [vmem:[%s1 + $0x10] sm:$0xff]
    %v173 = vld [vmem:[%s1 + $0x18] sm:$0xff]
    %v174 = vld [vmem:[%s1 + $0x20] sm:$0xff]
    %v175 = vld [vmem:[%s1 + $0x28] sm:$0xff]
    %v176 = vld [vmem:[%s1 + $0x30] sm:$0xff]
    %v177 = vld [vmem:[%s1 + $0x38] sm:$0xff]
    %v178 = vld [vmem:[%s1 + $0x40] sm:$0xff]
    %v179 = vld [vmem:[%s1 + $0x48] sm:$0xff]
    %v180 = vld [vmem:[%s1 + $0x50] sm:$0xff]
    %v181 = vld [vmem:[%s1 + $0x58] sm:$0xff]
    %v182 = vld [vmem:[%s1 + $0x60] sm:$0xff]
    %v183 = vld [vmem:[%s1 + $0x68] sm:$0xff]
    %v184 = vld [vmem:[%s1 + $0x70] sm:$0xff]
    %v185 = vld [vmem:[%s1 + $0x78] sm:$0xff]
    %v186 = vld [vmem:[#allocation6] sm:$0xff]
    %v187 = vld [vmem:[#allocation6 + $0x8] sm:$0xff]
    %v188 = vld [vmem:[#allocation6 + $0x10] sm:$0xff]
    %v189 = vld [vmem:[#allocation6 + $0x18] sm:$0xff]
    %v190 = vld [vmem:[#allocation6 + $0x20] sm:$0xff]
    %v191 = vld [vmem:[#allocation6 + $0x28] sm:$0xff]
    %v192 = vld [vmem:[#allocation6 + $0x30] sm:$0xff]
    %v193 = vld [vmem:[#allocation6 + $0x38] sm:$0xff]
    %v194 = vld [vmem:[#allocation6 + $0x40] sm:$0xff]
    %v195 = vld [vmem:[#allocation6 + $0x48] sm:$0xff]
    %v196 = vld [vmem:[#allocation6 + $0x50] sm:$0xff]
    %v197 = vld [vmem:[#allocation6 + $0x58] sm:$0xff]
    %v198 = vld [vmem:[#allocation6 + $0x60] sm:$0xff]
    %v199 = vld [vmem:[#allocation6 + $0x68] sm:$0xff]
    %v200 = vld [vmem:[#allocation6 + $0x70] sm:$0xff]
    %v201 = vld [vmem:[#allocation6 + $0x78] sm:$0xff]
    %v202 = vmul.f32 %v186, %v154
    %v203 = vmul.f32 %v187, %v155
    %v204 = vmul.f32 %v188, %v156
    %v205 = vmul.f32 %v189, %v157
    %v206 = vmul.f32 %v190, %v158
    %v207 = vmul.f32 %v191, %v159
    %v208 = vmul.f32 %v192, %v160
    %v209 = vmul.f32 %v193, %v161
    %v210 = vmul.f32 %v194, %v162
    %v211 = vmul.f32 %v195, %v163
    %v212 = vmul.f32 %v196, %v164
    %v213 = vmul.f32 %v197, %v165
    %v214 = vmul.f32 %v198, %v166
    %v215 = vmul.f32 %v199, %v167
    %v216 = vmul.f32 %v200, %v168
    %v217 = vmul.f32 %v201, %v169
    %v218 = vadd.f32 %v170, %v202
    %v219 = vadd.f32 %v171, %v203
    %v220 = vadd.f32 %v172, %v204
    %v221 = vadd.f32 %v173, %v205
    %v222 = vadd.f32 %v174, %v206
    %v223 = vadd.f32 %v175, %v207
    %v224 = vadd.f32 %v176, %v208
    %v225 = vadd.f32 %v177, %v209
    %v226 = vadd.f32 %v178, %v210
    %v227 = vadd.f32 %v179, %v211
    %v228 = vadd.f32 %v180, %v212
    %v229 = vadd.f32 %v181, %v213
    %v230 = vadd.f32 %v182, %v214
    %v231 = vadd.f32 %v183, %v215
    %v232 = vadd.f32 %v184, %v216
    %v233 = vadd.f32 %v185, %v217
    %v234 = vld [vmem:[#allocation3] sm:$0xff]
    %235 = vmatpush.msra.mxu0 %v233
    %236 = vmatpush.msra.mxu0 %v232
    %237 = vmatpush.msra.mxu0 %v231
    %238 = vmatpush.msra.mxu0 %v230
    %239 = vmatpush.msra.mxu0 %v229
    %240 = vmatpush.msra.mxu0 %v228
    %241 = vmatpush.msra.mxu0 %v227
    %242 = vmatpush.msra.mxu0 %v226
    %243 = vmatpush.msra.mxu0 %v225
    %244 = vmatpush.msra.mxu0 %v224
    %245 = vmatpush.msra.mxu0 %v223
    %246 = vmatpush.msra.mxu0 %v222
    %247 = vmatpush.msra.mxu0 %v221
    %248 = vmatpush.msra.mxu0 %v220
    %249 = vmatpush.msra.mxu0 %v219
    %250 = vmatpush.msra.mxu0 %v218
    %251 = vmatmul.f32.gmra.mxu0 %v234
    %v252 = vpop.f32.mrf.mxu0
    %v253 = vadd.f32 0.0, %v252
    %254 = vdwg.mxu0
    %p255 = scmp.eq.s32.totalorder 0, 0
    // Predicated region
    $region34: #{tpu_custom_call.1} parent=1 // pred_check
      %p256 = pneg %p255
    $region35: #{tpu_custom_call.1} parent=1 // pred_check_branch
      %258 = sbr.rel (%p256) target = $region37
    $region36: #{tpu_custom_call.1} parent=1 // pred_region
      %259 = vst [vmem:[#allocation2] sm:$0xff] %v253
    $region37: #{tpu_custom_call.1} parent=1 // pred_fallthru
      _
    %p260 = scmp.gt.s32.totalorder 0, 0
    // Predicated region
    $region38: #{tpu_custom_call.1} parent=1 // pred_check
      %p261 = pneg %p260
    $region39: #{tpu_custom_call.1} parent=1 // pred_check_branch
      %263 = sbr.rel (%p261) target = $region41
    $region40: #{tpu_custom_call.1} parent=1 // pred_region
      %v264 = vld [vmem:[#allocation2] sm:$0xff]
      %v265 = vadd.f32 %v264, %v253
      %266 = vst [vmem:[#allocation2] sm:$0xff] %v265
    $region41: #{tpu_custom_call.1} parent=1 // pred_fallthru
      _
    // Predicated region
    $region42: #{tpu_custom_call.1} parent=1 // pred_check
      %p267 = pneg %p255
    $region43: #{tpu_custom_call.1} parent=1 // pred_check_branch
      %269 = sbr.rel (%p267) target = $region45
    $region44: #{tpu_custom_call.1} parent=1 // pred_region
      %v270 = vld [vmem:[#allocation2] sm:$0xff]
      %v271 = vld [vmem:[%s5] sm:$0x1]
      %v273 = vperm.slane %v271, 0
      %v275 = vadd.f32 %v270, %v273
      %276 = vst [vmem:[#allocation8] sm:$0xff] %v275
    $region45: #{tpu_custom_call.1} parent=1 // pred_fallthru
      _
    // Predicated region
    $region46: #{tpu_custom_call.1} parent=1 // pred_check
      _
    $region47: #{tpu_custom_call.1} parent=1 // pred_check_branch
      %278 = sbr.rel (0) target = $region49
    $region48: #{tpu_custom_call.1} parent=1 // pred_region
      %280 = vsyncadd [#allocation5], 0
      %s282 = sshll.u32 [#allocation8], 4
      %s283 = int_to_ptr.vmem [resolvable:$true] %s282
      %s284 = sshll.u32 %s6, 4
      %s285 = int_to_ptr.hbm [resolvable:$true] %s284
      %287 = dma.vmem_to_hbm [thread:$0]  %s283, 128, %s285, [#allocation5]
    $region49: #{tpu_custom_call.1} parent=1 // pred_fallthru
      _
    // Predicated region
    $region50: #{tpu_custom_call.1} parent=1 // pred_check
      _
    $region51: #{tpu_custom_call.1} parent=1 // pred_check_branch
      %289 = sbr.rel (0) target = $region53
    $region52: #{tpu_custom_call.1} parent=1 // pred_region
      %291 = dma.done [#allocation5], 128
    $region53: #{tpu_custom_call.1} parent=1 // pred_fallthru
      _
    %292 = vsyncpa [#allocation4], 1
    %293 = vsyncpa [#allocation7], 1
    %294 = vsyncpa [#allocation5], 1

</llo_original>
